<compile_context>
chip_gen: v6e
topology: v6e:2x2x1
jax: 0.10.0
libtpu: 0.0.40
codegen_flags: <defaults>
</compile_context>

<pallas_src>
import jax
import jax.numpy as jnp
from jax.experimental import pallas as pl
from jax.experimental.pallas import tpu as pltpu


# ----------------------------------------------------------------------------
# Kernels
# ----------------------------------------------------------------------------
def _hard_loss_kernel(logits_ref, la_ref, lb_ref, lam_ref, out_ref):
    """epoch < es: loss_i = -(lam*pred[i,ya] + (1-lam)*pred[i,yb]) with
    pred = softmax(logits).  Fused: loss_i = -sum(e * w) / sum(e),
    w = lam*[cls==ya] + (1-lam)*[cls==yb]; softmax never materialized."""

    @pl.when(pl.program_id(0) == 0)
    def _init():
        out_ref[...] = jnp.zeros_like(out_ref)

    logits = logits_ref[...].astype(jnp.float32)               # (TB, C)
    m = jnp.max(logits, axis=1, keepdims=True)
    e = jnp.exp(logits - m)                                     # (TB, C)
    sum_e = jnp.sum(e, axis=1, keepdims=True)                   # (TB, 1)

    tb, c = logits.shape
    cls = jax.lax.broadcasted_iota(jnp.int32, (tb, c), 1)       # class ids (lanes)
    lam = lam_ref[...]                                          # (TB, 1)
    w = (jnp.where(cls == la_ref[...], lam, 0.0)
         + jnp.where(cls == lb_ref[...], 1.0 - lam, 0.0))       # (TB, C)
    num = jnp.sum(e * w, axis=1, keepdims=True)                 # (TB, 1)
    loss = -(num / sum_e)                                       # TB exact divides only
    out_ref[...] += jnp.sum(loss, keepdims=True)                # (1,1) tile partial


def _soft_loss_kernel(logits_ref, soft_a_ref, soft_b_ref, lam_ref, out_ref):
    """epoch >= es: loss_i = -sum(log_softmax(logits_i) * mixed_i),
    mixed_i = lam*soft_labels[index[i]] + (1-lam)*soft_labels[index[nn_index[i]]].
    logsumexp formulation; the two soft-label terms are fused into one
    reduction per row."""

    @pl.when(pl.program_id(0) == 0)
    def _init():
        out_ref[...] = jnp.zeros_like(out_ref)

    logits = logits_ref[...].astype(jnp.float32)                # (TB, C)
    m = jnp.max(logits, axis=1, keepdims=True)
    shifted = logits - m
    lse = jnp.log(jnp.sum(jnp.exp(shifted), axis=1, keepdims=True))  # (TB, 1)
    logp = shifted - lse                                        # log-softmax

    lam = lam_ref[...]                                          # (TB, 1)
    mixed = (lam * soft_a_ref[...].astype(jnp.float32)
             + (1.0 - lam) * soft_b_ref[...].astype(jnp.float32))    # (TB, C)
    row_loss = -jnp.sum(logp * mixed, axis=1, keepdims=True)    # (TB, 1)
    out_ref[...] += jnp.sum(row_loss, keepdims=True)            # (1,1) tile partial


# ----------------------------------------------------------------------------
# Wrappers
# ----------------------------------------------------------------------------
def _pick_batch_tile(b, c, n_wide_inputs, max_tile=512, vmem_budget=24 << 20):
    """Largest batch tile that (a) divides b, (b) is a multiple of 8, and
    (c) keeps the double-buffered f32 (TB, C) blocks within a VMEM budget.
    Falls back to the full batch (single tile) otherwise."""
    per_row_bytes = max(1, c * 4 * n_wide_inputs * 2)   # f32, double-buffered
    cap = min(max_tile, vmem_budget // per_row_bytes)
    cap = max(8, (cap // 8) * 8)
    if b <= cap:
        return b
    best = 0
    for t in range(8, cap + 1, 8):
        if b % t == 0:
            best = t
    return best if best else b


def _hard_mixup_loss(logits, labels_a, labels_b, lam_col):
    b, c = logits.shape
    tb = _pick_batch_tile(b, c, n_wide_inputs=1)
    n_tiles = b // tb
    total = pl.pallas_call(
        _hard_loss_kernel,
        out_shape=jax.ShapeDtypeStruct((1, 1), jnp.float32),
        grid_spec=pltpu.PrefetchScalarGridSpec(
            num_scalar_prefetch=0,
            grid=(n_tiles,),
            in_specs=[
                pl.BlockSpec((tb, c), lambda i: (i, 0)),   # logits (native dtype)
                pl.BlockSpec((tb, 1), lambda i: (i, 0)),   # labels_a
                pl.BlockSpec((tb, 1), lambda i: (i, 0)),   # labels_b
                pl.BlockSpec((tb, 1), lambda i: (i, 0)),   # lam
            ],
            out_specs=pl.BlockSpec((1, 1), lambda i: (0, 0)),  # resident accumulator
        ),
        compiler_params=pltpu.CompilerParams(
            dimension_semantics=("arbitrary",)),
    )(logits, labels_a, labels_b, lam_col)
    return total[0, 0] / b


def _soft_mixup_loss(logits, soft_a, soft_b, lam_col):
    b, c = logits.shape
    tb = _pick_batch_tile(b, c, n_wide_inputs=3)
    n_tiles = b // tb
    total = pl.pallas_call(
        _soft_loss_kernel,
        out_shape=jax.ShapeDtypeStruct((1, 1), jnp.float32),
        grid_spec=pltpu.PrefetchScalarGridSpec(
            num_scalar_prefetch=0,
            grid=(n_tiles,),
            in_specs=[
                pl.BlockSpec((tb, c), lambda i: (i, 0)),   # logits tile
                pl.BlockSpec((tb, c), lambda i: (i, 0)),   # soft_labels[index]
                pl.BlockSpec((tb, c), lambda i: (i, 0)),   # soft_labels[index[nn_index]]
                pl.BlockSpec((tb, 1), lambda i: (i, 0)),   # lam
            ],
            out_specs=pl.BlockSpec((1, 1), lambda i: (0, 0)),  # resident accumulator
        ),
        compiler_params=pltpu.CompilerParams(
            dimension_semantics=("arbitrary",)),
    )(logits, soft_a, soft_b, lam_col)
    return total[0, 0] / b


class ANNLossK2:
    """JAX/Pallas port of the PyTorch ANNLoss_K_2 module (forward pass)."""

    def __init__(self, labels, num_classes, es=60, momentum=0.9):
        self.num_classes = num_classes
        # soft_labels[arange(N), labels] = 1  -> one-hot, float32
        self.soft_labels = jax.nn.one_hot(labels, num_classes, dtype=jnp.float32)
        self.es = es
        self.momentum = momentum

    def __call__(self, logits, logits_ori, labels_a, labels_b, index, nn_index, lam, epoch):
        b = logits.shape[0]
        lam = jnp.asarray(lam, jnp.float32).reshape(-1)
        if lam.shape[0] == 1:
            lam = jnp.broadcast_to(lam, (b,))
        lam_col = lam.reshape(b, 1)

        if epoch < self.es:
            la = labels_a.astype(jnp.int32).reshape(b, 1)
            lb = labels_b.astype(jnp.int32).reshape(b, 1)
            return _hard_mixup_loss(logits, la, lb, lam_col)
        else:
            if epoch % 10 == 0:
                # TODO(synk): stateful EMA update of the dataset-sized soft-label
                # table (gather + scatter) stays in plain JAX; it is off the
                # per-step loss hot path.
                pred_ori = jax.nn.softmax(logits_ori.astype(jnp.float32), axis=1)
                upd = (self.momentum * self.soft_labels[index]
                       + (1.0 - self.momentum) * pred_ori)
                self.soft_labels = self.soft_labels.at[index].set(upd)
            idx_a = jnp.asarray(index, jnp.int32)
            idx_b = idx_a[jnp.asarray(nn_index, jnp.int32)]
            soft_a = jnp.take(self.soft_labels, idx_a, axis=0)
            soft_b = jnp.take(self.soft_labels, idx_b, axis=0)
            return _soft_mixup_loss(logits, soft_a, soft_b, lam_col)


if __name__ == "__main__":
    key = jax.random.PRNGKey(0)
    B, C, N = 16, 128, 64  # batch, num_classes, dataset size
    k1, k2, k3, k4, k5, k6, k7, k8 = jax.random.split(key, 8)

    dataset_labels = jax.random.randint(k1, (N,), 0, C)
    loss_mod = ANNLossK2(dataset_labels, C, es=60, momentum=0.9)

    logits = jax.random.normal(k2, (B, C), jnp.float32)
    logits_ori = jax.random.normal(k3, (B, C), jnp.float32)
    labels_a = jax.random.randint(k4, (B,), 0, C)
    labels_b = jax.random.randint(k5, (B,), 0, C)
    index = jax.random.permutation(k6, N)[:B]
    nn_index = jax.random.randint(k7, (B,), 0, B)
    lam = jax.random.uniform(k8, (B,), jnp.float32)

    # Branch 1: epoch < es (hard mixup labels)
    loss_hard = loss_mod(logits, logits_ori, labels_a, labels_b, index, nn_index, lam, epoch=5)
    loss_hard = jax.block_until_ready(loss_hard)

    # Branch 2: epoch >= es (soft labels, with EMA refresh since epoch % 10 == 0)
    loss_soft = loss_mod(logits, logits_ori, labels_a, labels_b, index, nn_index, lam, epoch=70)
    loss_soft = jax.block_until_ready(loss_soft)

    # Pure-JAX reference check
    pred = jax.nn.softmax(logits, axis=1)
    l1r = -pred[jnp.arange(B), labels_a]
    l2r = -pred[jnp.arange(B), labels_b]
    ref_hard = jnp.mean(lam * l1r + (1.0 - lam) * l2r)

    logp = jnp.log(pred)
    sa = loss_mod.soft_labels[index]
    sb = loss_mod.soft_labels[index[nn_index]]
    ref_soft = jnp.mean(
        lam * (-jnp.sum(logp * sa, axis=1)) + (1.0 - lam) * (-jnp.sum(logp * sb, axis=1))
    )

    assert jnp.allclose(loss_hard, ref_hard, atol=1e-5), (loss_hard, ref_hard)
    assert jnp.allclose(loss_soft, ref_soft, atol=1e-5), (loss_soft, ref_soft)
    print("KERNEL_OK")
</pallas_src>

<mosaic_0001>
module attributes {stable_mosaic.version = 11 : i64} {
  func.func @_hard_loss_kernel(%arg0: i32, %arg1: memref<16x128xf32, #tpu.memory_space<vmem>>, %arg2: memref<16x1xi32, #tpu.memory_space<vmem>>, %arg3: memref<16x1xi32, #tpu.memory_space<vmem>>, %arg4: memref<16x1xf32, #tpu.memory_space<vmem>>, %arg5: memref<1x1xf32, #tpu.memory_space<vmem>>) attributes {dimension_semantics = [#tpu.dimension_semantics<arbitrary>], iteration_bounds = array<i64: 1>, scalar_prefetch = 0 : i64, scratch_operands = 0 : i64, tpu.core_type = #tpu.core_type<tc>, window_params = [{transform_indices = @transform_0, window_bounds = array<i64: 16, 128>}, {transform_indices = @transform_1, window_bounds = array<i64: 16, 1>}, {transform_indices = @transform_2, window_bounds = array<i64: 16, 1>}, {transform_indices = @transform_3, window_bounds = array<i64: 16, 1>}, {pipeline_mode = #tpu.pipeline_mode<synchronous>, transform_indices = @transform_4, window_bounds = array<i64: 1, 1>}]} {
    %c0_i32 = arith.constant 0 : i32
    %0 = arith.cmpi eq, %arg0, %c0_i32 : i32
    %1 = arith.extui %0 : i1 to i32
    %c0_i32_0 = arith.constant 0 : i32
    %2 = arith.cmpi ne, %1, %c0_i32_0 : i32
    scf.if %2 {
      %cst_19 = arith.constant 0.000000e+00 : f32
      %44 = vector.broadcast %cst_19 : f32 to vector<1x1xf32>
      %c0_20 = arith.constant 0 : index
      %c0_21 = arith.constant 0 : index
      %45 = vector.load %arg5[%c0_20, %c0_21] : memref<1x1xf32, #tpu.memory_space<vmem>>, vector<1x1xf32>
      tpu.vector_store %arg5[%c0_20, %c0_21], %44 {strides = array<i32>} : memref<1x1xf32, #tpu.memory_space<vmem>>, vector<1x1xf32>,
    } else {
    }
    %c0 = arith.constant 0 : index
    %c0_1 = arith.constant 0 : index
    %3 = vector.load %arg1[%c0, %c0_1] : memref<16x128xf32, #tpu.memory_space<vmem>>, vector<16x128xf32>
    %cst = arith.constant dense<0xFF800000> : vector<16xf32>
    %4 = vector.multi_reduction <maximumf>, %3, %cst [1] : vector<16x128xf32> to vector<16xf32>
    %5 = vector.shape_cast %4 : vector<16xf32> to vector<16x1xf32>
    %6 = vector.broadcast %5 : vector<16x1xf32> to vector<16x128xf32>
    %7 = arith.subf %3, %6 : vector<16x128xf32>
    %8 = math.exp %7 : vector<16x128xf32>
    %cst_2 = arith.constant dense<0.000000e+00> : vector<16xf32>
    %9 = vector.multi_reduction <add>, %8, %cst_2 [1] : vector<16x128xf32> to vector<16xf32>
    %10 = vector.shape_cast %9 : vector<16xf32> to vector<16x1xf32>
    %11 = tpu.iota {dimensions = array<i32: 1>} : vector<16x128xi32>
    %c0_3 = arith.constant 0 : index
    %c0_4 = arith.constant 0 : index
    %12 = vector.load %arg4[%c0_3, %c0_4] : memref<16x1xf32, #tpu.memory_space<vmem>>, vector<16x1xf32>
    %c0_5 = arith.constant 0 : index
    %c0_6 = arith.constant 0 : index
    %13 = vector.load %arg2[%c0_5, %c0_6] : memref<16x1xi32, #tpu.memory_space<vmem>>, vector<16x1xi32>
    %14 = vector.broadcast %13 : vector<16x1xi32> to vector<16x128xi32>
    %15 = arith.cmpi eq, %11, %14 : vector<16x128xi32>
    %cst_7 = arith.constant 0.000000e+00 : f32
    %16 = vector.shape_cast %12 : vector<16x1xf32> to vector<16x1xf32>
    %17 = vector.broadcast %16 : vector<16x1xf32> to vector<16x128xf32>
    %18 = vector.broadcast %cst_7 : f32 to vector<16x128xf32>
    %19 = arith.select %15, %17, %18 : vector<16x128xi1>, vector<16x128xf32>
    %c0_8 = arith.constant 0 : index
    %c0_9 = arith.constant 0 : index
    %20 = vector.load %arg3[%c0_8, %c0_9] : memref<16x1xi32, #tpu.memory_space<vmem>>, vector<16x1xi32>
    %21 = vector.broadcast %20 : vector<16x1xi32> to vector<16x128xi32>
    %22 = arith.cmpi eq, %11, %21 : vector<16x128xi32>
    %cst_10 = arith.constant 1.000000e+00 : f32
    %23 = vector.broadcast %cst_10 : f32 to vector<16x1xf32>
    %24 = arith.subf %23, %12 : vector<16x1xf32>
    %cst_11 = arith.constant 0.000000e+00 : f32
    %25 = vector.shape_cast %24 : vector<16x1xf32> to vector<16x1xf32>
    %26 = vector.broadcast %25 : vector<16x1xf32> to vector<16x128xf32>
    %27 = vector.broadcast %cst_11 : f32 to vector<16x128xf32>
    %28 = arith.select %22, %26, %27 : vector<16x128xi1>, vector<16x128xf32>
    %29 = arith.addf %19, %28 : vector<16x128xf32>
    %30 = arith.mulf %8, %29 : vector<16x128xf32>
    %cst_12 = arith.constant dense<0.000000e+00> : vector<16xf32>
    %31 = vector.multi_reduction <add>, %30, %cst_12 [1] : vector<16x128xf32> to vector<16xf32>
    %32 = vector.shape_cast %31 : vector<16xf32> to vector<16x1xf32>
    %33 = arith.divf %32, %10 : vector<16x1xf32>
    %cst_13 = arith.constant 0.000000e+00 : f32
    %34 = vector.broadcast %cst_13 : f32 to vector<16x1xf32>
    %35 = arith.subf %34, %33 : vector<16x1xf32>
    %c0_14 = arith.constant 0 : index
    %c0_15 = arith.constant 0 : index
    %36 = vector.load %arg5[%c0_14, %c0_15] : memref<1x1xf32, #tpu.memory_space<vmem>>, vector<1x1xf32>
    %37 = vector.shape_cast %35 : vector<16x1xf32> to vector<1x16x1xf32>
    %cst_16 = arith.constant dense<0.000000e+00> : vector<1xf32>
    %38 = vector.multi_reduction <add>, %37, %cst_16 [1, 2] : vector<1x16x1xf32> to vector<1xf32>
    %39 = vector.shape_cast %38 : vector<1xf32> to vector<1x1x1xf32>
    %40 = vector.extract %39[0, 0, 0] : f32 from vector<1x1x1xf32>
    %41 = vector.broadcast %40 : f32 to vector<1x1xf32>
    %42 = arith.addf %36, %41 : vector<1x1xf32>
    %c0_17 = arith.constant 0 : index
    %c0_18 = arith.constant 0 : index
    %43 = vector.load %arg5[%c0_17, %c0_18] : memref<1x1xf32, #tpu.memory_space<vmem>>, vector<1x1xf32>
    tpu.vector_store %arg5[%c0_17, %c0_18], %42 {strides = array<i32>} : memref<1x1xf32, #tpu.memory_space<vmem>>, vector<1x1xf32>,
    return
  }
  func.func @transform_0(%arg0: i32) -> (i32, i32) {
    %c0_i32 = arith.constant 0 : i32
    %c0_i32_0 = arith.constant 0 : i32
    return %arg0, %c0_i32 : i32, i32
  }
  func.func @transform_1(%arg0: i32) -> (i32, i32) {
    %c0_i32 = arith.constant 0 : i32
    %c0_i32_0 = arith.constant 0 : i32
    return %arg0, %c0_i32 : i32, i32
  }
  func.func @transform_2(%arg0: i32) -> (i32, i32) {
    %c0_i32 = arith.constant 0 : i32
    %c0_i32_0 = arith.constant 0 : i32
    return %arg0, %c0_i32 : i32, i32
  }
  func.func @transform_3(%arg0: i32) -> (i32, i32) {
    %c0_i32 = arith.constant 0 : i32
    %c0_i32_0 = arith.constant 0 : i32
    return %arg0, %c0_i32 : i32, i32
  }
  func.func @transform_4(%arg0: i32) -> (i32, i32) {
    %c0_i32 = arith.constant 0 : i32
    %c0_i32_0 = arith.constant 0 : i32
    %c0_i32_1 = arith.constant 0 : i32
    return %c0_i32, %c0_i32_0 : i32, i32
  }
}

</mosaic_0001>

<llo_original>
// kernel: tpu_custom_call.1
$region0: #{tpu_custom_call.1}
  #allocation0 [shape = 'u32[]', space=smem, size = 0x4, offset = 0x4, fixed_abs, tag = 'smem constant byte address 0x4 - core index']
  #allocation1 [shape = 'u32[144,128]{1,0:T(1,128)}', space=vmem, size = 0x12000, scoped, tag = 'internal scratch']
  %s0 = inlined_call_operand.vmem [shape: f32[16,128], index: 0, kind: input, shape index: {}]
  %s1 = inlined_call_operand.vmem [shape: s32[16,1], index: 1, kind: input, shape index: {}]
  %s2 = inlined_call_operand.vmem [shape: s32[16,1], index: 2, kind: input, shape index: {}]
  %s3 = inlined_call_operand.vmem [shape: f32[16,1], index: 3, kind: input, shape index: {}]
  %s4 = inlined_call_operand.hbm [shape: f32[1,1], index: 4, kind: output, shape index: {}]
  %s5 = sld [smem:[#allocation0]]
  $region30: #{tpu_custom_call.1} parent=0
    _
  %s7 = ssub.s32 1, %s5
  %s8 = scalar_select 0, %s7, %s5
  $region1: #{tpu_custom_call.1} parent=0
    #allocation2 [shape = 'u8[512]{0}', space=vmem, size = 0x400, scoped, tag = 'output window, operand 0, single buffered']
    #allocation3 [shape = 's32[1]{0}', space=sflag, size = 0x4, scoped, tag = 'scoped memory for tpu_custom_call.1']
    %9 = vsyncpa [#allocation3], 0
    // Predicated region
    $region2: #{tpu_custom_call.1} parent=1 // pred_check
      _
    $region3: #{tpu_custom_call.1} parent=1 // pred_check_branch
      %11 = sbr.rel (0) target = $region5
    $region4: #{tpu_custom_call.1} parent=1 // pred_region
      _
    $region5: #{tpu_custom_call.1} parent=1 // pred_fallthru
      _
    // Predicated region
    $region6: #{tpu_custom_call.1} parent=1 // pred_check
      _
    $region7: #{tpu_custom_call.1} parent=1 // pred_check_branch
      %13 = sbr.rel (0) target = $region9
    $region8: #{tpu_custom_call.1} parent=1 // pred_region
      _
    $region9: #{tpu_custom_call.1} parent=1 // pred_fallthru
      _
    // Predicated region
    $region10: #{tpu_custom_call.1} parent=1 // pred_check
      _
    $region11: #{tpu_custom_call.1} parent=1 // pred_check_branch
      %15 = sbr.rel (0) target = $region13
    $region12: #{tpu_custom_call.1} parent=1 // pred_region
      _
    $region13: #{tpu_custom_call.1} parent=1 // pred_fallthru
      _
    // Predicated region
    $region14: #{tpu_custom_call.1} parent=1 // pred_check
      _
    $region15: #{tpu_custom_call.1} parent=1 // pred_check_branch
      %17 = sbr.rel (0) target = $region17
    $region16: #{tpu_custom_call.1} parent=1 // pred_region
      _
    $region17: #{tpu_custom_call.1} parent=1 // pred_fallthru
      _
    %p18 = scmp.eq.s32.totalorder 0, 0
    // Predicated region
    $region18: #{tpu_custom_call.1} parent=1 // pred_check
      %p19 = pneg %p18
    $region19: #{tpu_custom_call.1} parent=1 // pred_check_branch
      %21 = sbr.rel (%p19) target = $region21
    $region20: #{tpu_custom_call.1} parent=1 // pred_region
      %vm22 = vcmask 0
      %23 = vst.msk [vmem:[#allocation2] sm:$0x1] %vm22, 0.0
    $region21: #{tpu_custom_call.1} parent=1 // pred_fallthru
      _
    %v24 = vld [vmem:[%s0] sm:$0xff]
    %v25 = vld [vmem:[%s0 + $0x8] sm:$0xff]
    %26 = vmax.xlane.f32.xlu0 %v24
    %v27 = vpop.xlane.xlu0 %26
    %28 = vmax.xlane.f32.xlu0 %v25
    %v29 = vpop.xlane.xlu0 %28
    %v30 = vsub.f32 %v24, %v27
    %v31 = vsub.f32 %v25, %v29
    %v32 = vmul.f32 %v30, 1.442695
    %v33 = vpow.pop %v32
    %v34 = vmul.f32 %v31, 1.442695
    %v35 = vpow.pop %v34
    %36 = vadd.xlane.f32.xlu0 %v33
    %v37 = vpop.xlane.xlu0 %36
    %38 = vadd.xlane.f32.xlu0 %v35
    %v39 = vpop.xlane.xlu0 %38
    %v40 = vlaneseq
    %v41 = vand.u32 %v40, 127
    %v42 = vld [vmem:[%s3] sm:$0xff]
    %v43 = vld [vmem:[%s3 + $0x8] sm:$0xff]
    %v44 = vld [vmem:[%s1] sm:$0xff]
    %v45 = vld [vmem:[%s1 + $0x8] sm:$0xff]
    %46 = vset.pattern.permute.xlu0 0
    %47 = vperm.xlu0 %46, %v44
    %v48 = vpop.permute.xlu0 %47
    %49 = vset.pattern.permute.xlu0 0
    %50 = vperm.xlu0 %49, %v45
    %v51 = vpop.permute.xlu0 %50
    %vm52 = vcmp.eq.s32.totalorder %v41, %v48
    %vm53 = vcmp.eq.s32.totalorder %v41, %v51
    %55 = vset.pattern.permute.xlu0 0
    %56 = vperm.xlu0 %55, %v42
    %v57 = vpop.permute.xlu0 %56
    %60 = vset.pattern.permute.xlu0 0
    %61 = vperm.xlu0 %60, %v43
    %v62 = vpop.permute.xlu0 %61
    %v64 = vsel %vm52, %v57, 0.0
    %v65 = vsel %vm53, %v62, 0.0
    %v66 = vld [vmem:[%s2] sm:$0xff]
    %v67 = vld [vmem:[%s2 + $0x8] sm:$0xff]
    %68 = vset.pattern.permute.xlu0 0
    %69 = vperm.xlu0 %68, %v66
    %v70 = vpop.permute.xlu0 %69
    %71 = vset.pattern.permute.xlu0 0
    %72 = vperm.xlu0 %71, %v67
    %v73 = vpop.permute.xlu0 %72
    %vm74 = vcmp.eq.s32.totalorder %v41, %v70
    %vm75 = vcmp.eq.s32.totalorder %v41, %v73
    %v76 = vsub.f32 1.0, %v42
    %v77 = vsub.f32 1.0, %v43
    %79 = vset.pattern.permute.xlu0 0
    %80 = vperm.xlu0 %79, %v76
    %v81 = vpop.permute.xlu0 %80
    %84 = vset.pattern.permute.xlu0 0
    %85 = vperm.xlu0 %84, %v77
    %v86 = vpop.permute.xlu0 %85
    %v88 = vsel %vm74, %v81, 0.0
    %v89 = vsel %vm75, %v86, 0.0
    %v90 = vadd.f32 %v64, %v88
    %v91 = vadd.f32 %v65, %v89
    %v92 = vmul.f32 %v33, %v90
    %v93 = vmul.f32 %v35, %v91
    %94 = vadd.xlane.f32.xlu0 %v92
    %v95 = vpop.xlane.xlu0 %94
    %96 = vadd.xlane.f32.xlu0 %v93
    %v97 = vpop.xlane.xlu0 %96
    %v98 = vrcp.pop %v37
    %v99 = vmul.f32 %v95, %v98
    %v100 = vrcp.pop %v39
    %v101 = vmul.f32 %v97, %v100
    %v102 = vsub.f32 0.0, %v99
    %v103 = vsub.f32 0.0, %v101
    %v104 = vld [vmem:[#allocation2] sm:$0x1]
    %vm105 = vcmask 7168
    %v106 = vsel %vm105, %v102, 0.0
    %v107 = vsel %vm105, %v103, 0.0
    %v108 = vadd.f32 %v106, %v107
    %109 = vadd.xlane.f32.xlu0 %v108
    %v110 = vpop.xlane.xlu0 %109
    %v111 = vrot.slane %v110, 4
    %v112 = vadd.f32 %v110, %v111
    %v113 = vrot.slane %v112, 2
    %v114 = vadd.f32 %v112, %v113
    %v115 = vrot.slane %v114, 1
    %v116 = vadd.f32 %v114, %v115
    %s117 = vtos %v116
    %v118 = vstv %s117
    %v119 = vadd.f32 %v104, %v118
    %vm120 = vcmask 0
    %121 = vst.msk [vmem:[#allocation2] sm:$0x1] %vm120, %v119
    // Predicated region
    $region22: #{tpu_custom_call.1} parent=1 // pred_check
      _
    $region23: #{tpu_custom_call.1} parent=1 // pred_check_branch
      %123 = sbr.rel (0) target = $region25
    $region24: #{tpu_custom_call.1} parent=1 // pred_region
      %s125 = ssub.s32 16, 16
      %126 = vsyncadd [#allocation3], %s125
      %s128 = sshll.u32 [#allocation2], 4
      %s129 = int_to_ptr.vmem [resolvable:$true] %s128
      %131 = dma.vmem_to_hbm [thread:$0]  %s129, 16, %s4, [#allocation3]
    $region25: #{tpu_custom_call.1} parent=1 // pred_fallthru
      _
    // Predicated region
    $region26: #{tpu_custom_call.1} parent=1 // pred_check
      _
    $region27: #{tpu_custom_call.1} parent=1 // pred_check_branch
      %133 = sbr.rel (0) target = $region29
    $region28: #{tpu_custom_call.1} parent=1 // pred_region
      %134 = dma.done [#allocation3], 16
    $region29: #{tpu_custom_call.1} parent=1 // pred_fallthru
      _
    %135 = vsyncpa [#allocation3], 1

</llo_original>
